<compile_context>
chip_gen: v7x
topology: tpu7x:2x2x1
jax: 0.10.0
libtpu: 0.0.40
codegen_flags: <defaults>
</compile_context>

<pallas_src>
import jax
import jax.numpy as jnp
from jax import lax
from jax.experimental import pallas as pl
from jax.experimental.pallas import tpu as pltpu


def _round_up(x, m):
    return ((x + m - 1) // m) * m


def _pick_tile(total, max_tile, align):
    """Largest multiple of `align` that divides `total` and is <= max_tile."""
    if total <= max_tile:
        return total
    best = align
    t = align
    while t <= max_tile:
        if total % t == 0:
            best = t
        t += align
    return best


def _vmem_capacity_bytes():
    try:
        cap = getattr(pltpu.get_tpu_info(), "vmem_capacity_bytes", None)
        if cap:
            return int(cap)
    except Exception:
        pass
    return 64 << 20  # conservative fallback: v7x per-TC physical VMEM


# ----------------------------- kernels -------------------------------------


def _mlp_kernel(x_ref, w_ref, b_ref, o_ref):
    # x_ref: (tm, Kp) f32 ; w_ref: (Kp, tn) bf16 ; b_ref: (1, tn) f32
    x = x_ref[...].astype(w_ref.dtype)                 # in-kernel bf16 cast (VPU filler)
    acc = jnp.dot(x, w_ref[...], preferred_element_type=jnp.float32)
    o_ref[...] = jnp.tanh(acc + b_ref[...]).astype(o_ref.dtype)


def _mlp_kernel_ksplit(x_ref, w_ref, b_ref, o_ref, acc_ref):
    # Same as above but with a K grid axis and an f32 VMEM accumulator.
    k = pl.program_id(2)

    @pl.when(k == 0)
    def _():
        acc_ref[...] = jnp.zeros_like(acc_ref)

    x = x_ref[...].astype(w_ref.dtype)
    acc_ref[...] += jnp.dot(x, w_ref[...], preferred_element_type=jnp.float32)

    @pl.when(k == pl.num_programs(2) - 1)
    def _():
        o_ref[...] = jnp.tanh(acc_ref[...] + b_ref[...]).astype(o_ref.dtype)


# ------------------------- packing (once per model) -------------------------


def pack_mlp_params(weight, bias, *, mxu_dtype=jnp.bfloat16):
    """One-time weight packing: bf16, transposed to [Kp, Np], lane/column padded.

    weight: [N, K] (PyTorch nn.Linear layout); bias: [N].
    Returns (w_packed [Kp, Np] bf16, b_packed [1, Np] f32).
    Do this once per model; do NOT pay it per forward call.
    """
    N, K = weight.shape
    Kp = _round_up(K, 128)
    Np = 128 if N <= 128 else _round_up(N, 256)   # 256-col align for v6e/v7x MXU
    w = jnp.asarray(weight).astype(mxu_dtype).T   # [K, N]; one-time HBM copy
    if (Kp, Np) != (K, N):
        w = jnp.pad(w, ((0, Kp - K), (0, Np - N)))
    b = jnp.asarray(bias).astype(jnp.float32)
    if Np != N:
        b = jnp.pad(b, (0, Np - N))
    return w, b.reshape(1, Np)


# ------------------------------ forward -------------------------------------


def mlp_layer_packed(features, w_packed, b_packed, n_out, *,
                     tm_max=256, tn_max=256, out_dtype=None, max_vmem_bytes=None):
    """features [..., K] f32; w_packed [Kp, Np] bf16; b_packed [1, Np] f32."""
    orig_shape = features.shape
    K = orig_shape[-1]
    x2d = features.reshape(-1, K)
    M = x2d.shape[0]
    Kp, Np = w_packed.shape
    assert K <= Kp < K + 128, "w_packed K padding inconsistent with features"
    assert b_packed.shape == (1, Np)
    assert 0 < n_out <= Np
    out_dtype = out_dtype if out_dtype is not None else features.dtype

    x_item = jnp.dtype(x2d.dtype).itemsize
    w_item = jnp.dtype(w_packed.dtype).itemsize
    out_item = jnp.dtype(out_dtype).itemsize

    # --- tile selection (tm<=256 so M=512-class shapes give 2 parallel steps) ---
    tm = min(_round_up(M, 8), tm_max)
    Mp = _round_up(M, tm)
    tn = min(tn_max, Np)
    if Np % tn:                       # fallback for unusual packing / tn_max choices
        tn = _pick_tile(Np, tn, 128)
    num_m, num_n = Mp // tm, Np // tn

    # --- activations stay f32; pad only when M or K actually need rounding ---
    if (Mp, Kp) != (M, K):
        x2d = jnp.pad(x2d, ((0, Mp - M), (0, Kp - K)))

    # --- generation-aware VMEM budget and optional K-split ---
    budget = max(_vmem_capacity_bytes() - (8 << 20), 16 << 20)
    if max_vmem_bytes is not None:
        budget = min(budget, int(max_vmem_bytes))

    def _need(tk, with_acc):
        n = 2 * (tm * tk * x_item + tk * tn * w_item + tn * 4 + tm * tn * out_item)
        return n + (tm * tn * 4 if with_acc else 0)

    fit_budget = max(budget - (4 << 20), 1 << 20)   # headroom for Mosaic scratch
    if _need(Kp, False) <= fit_budget:
        tk, nk = Kp, 1
    else:
        denom = 2 * (tm * x_item + tn * w_item)
        spare = fit_budget - 2 * (tn * 4 + tm * tn * out_item) - tm * tn * 4
        tk_max = max(spare // denom, 128)
        tk = _pick_tile(Kp, tk_max, 128)
        nk = Kp // tk

    vmem_limit = int(min(budget, max(_need(tk, nk > 1) + (8 << 20), 32 << 20)))

    cost = pl.CostEstimate(
        flops=2 * Mp * Kp * Np,
        transcendentals=Mp * Np,
        bytes_accessed=(Mp * Kp * x_item + Kp * Np * w_item
                        + Np * 4 + Mp * Np * out_item),
    )

    if nk == 1:
        # Put the re-streamed operand on the slow axis (the other is fetched once
        # per outer step since its block index is constant on the fast axis).
        w_restream = num_m * Kp * Np * w_item
        x_restream = num_n * Mp * Kp * x_item
        if w_restream <= x_restream:
            grid = (num_m, num_n)
            x_map = lambda i, j: (i, 0)
            w_map = lambda i, j: (0, j)
            b_map = lambda i, j: (0, j)
            o_map = lambda i, j: (i, j)
        else:
            grid = (num_n, num_m)
            x_map = lambda j, i: (i, 0)
            w_map = lambda j, i: (0, j)
            b_map = lambda j, i: (0, j)
            o_map = lambda j, i: (i, j)
        kernel = _mlp_kernel
        scratch = []
        semantics = ("parallel", "parallel")
    else:
        grid = (num_m, num_n, nk)
        x_map = lambda i, j, k: (i, k)
        w_map = lambda i, j, k: (k, j)
        b_map = lambda i, j, k: (0, j)
        o_map = lambda i, j, k: (i, j)
        kernel = _mlp_kernel_ksplit
        scratch = [pltpu.VMEM((tm, tn), jnp.float32)]
        semantics = ("parallel", "parallel", "arbitrary")

    out_padded = pl.pallas_call(
        kernel,
        out_shape=jax.ShapeDtypeStruct((Mp, Np), out_dtype),
        grid_spec=pltpu.PrefetchScalarGridSpec(
            num_scalar_prefetch=0,
            grid=grid,
            in_specs=[
                pl.BlockSpec((tm, tk), x_map),   # activation row tile (f32)
                pl.BlockSpec((tk, tn), w_map),   # pre-packed [Kp, Np] bf16 weight tile
                pl.BlockSpec((1, tn), b_map),    # f32 bias tile
            ],
            out_specs=pl.BlockSpec((tm, tn), o_map),
            scratch_shapes=scratch,
        ),
        compiler_params=pltpu.CompilerParams(
            dimension_semantics=semantics,
            vmem_limit_bytes=vmem_limit,
        ),
        cost_estimate=cost,
    )(x2d, w_packed, b_packed)

    out = out_padded
    if (Mp, Np) != (M, n_out):
        out = out[:M, :n_out]
    return out.reshape(orig_shape[:-1] + (n_out,))


def mlp_layer(features, weight, bias, **kwargs):
    """Convenience wrapper: packs per call. In real use, call pack_mlp_params
    once per model and use mlp_layer_packed directly."""
    w_packed, b_packed = pack_mlp_params(weight, bias)
    return mlp_layer_packed(features, w_packed, b_packed, weight.shape[0], **kwargs)


# ------------------------------- tests --------------------------------------

if __name__ == "__main__":
    key = jax.random.PRNGKey(0)
    k_x, k_w, k_b = jax.random.split(key, 3)

    # --- test 1: module-sized shapes (batch=2, seq=8, hidden=32) ---
    batch, seq, input_size, output_size = 2, 8, 32, 32
    features = jax.random.normal(k_x, (batch, seq, input_size), dtype=jnp.float32)
    weight = jax.random.normal(k_w, (output_size, input_size), dtype=jnp.float32) * 0.1
    bias = jax.random.normal(k_b, (output_size,), dtype=jnp.float32) * 0.1

    w_packed, b_packed = pack_mlp_params(weight, bias)   # one-time per-model packing
    out = jax.block_until_ready(
        mlp_layer_packed(features, w_packed, b_packed, output_size))
    assert out.shape == (batch, seq, output_size)

    xb = features.astype(jnp.bfloat16).astype(jnp.float32)
    wb = weight.astype(jnp.bfloat16).astype(jnp.float32)
    ref = jnp.tanh(jnp.einsum("bsk,nk->bsn", xb, wb,
                              precision=lax.Precision.HIGHEST) + bias)
    assert jnp.allclose(out, ref, atol=1e-4, rtol=1e-4), "mismatch vs bf16 reference"
    ref_f32 = jnp.tanh(jnp.einsum("bsk,nk->bsn", features, weight,
                                  precision=lax.Precision.HIGHEST) + bias)
    assert jnp.allclose(out, ref_f32, atol=3e-2, rtol=3e-2), "mismatch vs f32 reference"

    # --- test 2: DeBERTa-pooler-sized, multi-tile parallel grid ---
    k_x2, k_w2, k_b2 = jax.random.split(jax.random.PRNGKey(1), 3)
    M2, K2, N2 = 512, 768, 768
    f2 = jax.random.normal(k_x2, (M2, K2), dtype=jnp.float32)
    w2 = jax.random.normal(k_w2, (N2, K2), dtype=jnp.float32) * 0.02
    b2 = jax.random.normal(k_b2, (N2,), dtype=jnp.float32) * 0.02
    out2 = jax.block_until_ready(mlp_layer(f2, w2, b2))
    ref2 = jnp.tanh(
        jnp.dot(f2.astype(jnp.bfloat16).astype(jnp.float32),
                w2.astype(jnp.bfloat16).astype(jnp.float32).T,
                precision=lax.Precision.HIGHEST) + b2)
    assert out2.shape == (M2, N2)
    assert jnp.allclose(out2, ref2, atol=1e-3, rtol=1e-3), "mismatch (large shape)"

    # --- test 3: force the K-split accumulator path with a tiny VMEM budget ---
    k_x3, k_w3, k_b3 = jax.random.split(jax.random.PRNGKey(2), 3)
    M3, K3, N3 = 256, 1024, 512
    f3 = jax.random.normal(k_x3, (M3, K3), dtype=jnp.float32)
    w3 = jax.random.normal(k_w3, (N3, K3), dtype=jnp.float32) * 0.02
    b3 = jax.random.normal(k_b3, (N3,), dtype=jnp.float32) * 0.02
    out3 = jax.block_until_ready(mlp_layer(f3, w3, b3, max_vmem_bytes=6 << 20))
    ref3 = jnp.tanh(
        jnp.dot(f3.astype(jnp.bfloat16).astype(jnp.float32),
                w3.astype(jnp.bfloat16).astype(jnp.float32).T,
                precision=lax.Precision.HIGHEST) + b3)
    assert out3.shape == (M3, N3)
    assert jnp.allclose(out3, ref3, atol=1e-3, rtol=1e-3), "mismatch (K-split path)"

    print("KERNEL_OK")
</pallas_src>

<mosaic_0001>
module attributes {stable_mosaic.version = 11 : i64} {
  func.func @_mlp_kernel(%arg0: i32, %arg1: i32, %arg2: memref<16x128xf32, #tpu.memory_space<vmem>>, %arg3: memref<128x128xbf16, #tpu.memory_space<vmem>>, %arg4: memref<1x128xf32, #tpu.memory_space<vmem>>, %arg5: memref<16x128xf32, #tpu.memory_space<vmem>>) attributes {dimension_semantics = [#tpu.dimension_semantics<parallel>, #tpu.dimension_semantics<parallel>], iteration_bounds = array<i64: 1, 1>, scalar_prefetch = 0 : i64, scratch_operands = 0 : i64, tpu.core_type = #tpu.core_type<tc>, window_params = [{transform_indices = @transform_0, window_bounds = array<i64: 16, 128>}, {transform_indices = @transform_1, window_bounds = array<i64: 128, 128>}, {transform_indices = @transform_2, window_bounds = array<i64: 1, 128>}, {transform_indices = @transform_3, window_bounds = array<i64: 16, 128>}]} {
    %c0 = arith.constant 0 : index
    %c0_0 = arith.constant 0 : index
    %0 = vector.load %arg2[%c0, %c0_0] : memref<16x128xf32, #tpu.memory_space<vmem>>, vector<16x128xf32>
    %1 = arith.truncf %0 : vector<16x128xf32> to vector<16x128xbf16>
    %c0_1 = arith.constant 0 : index
    %c0_2 = arith.constant 0 : index
    %2 = vector.load %arg3[%c0_1, %c0_2] : memref<128x128xbf16, #tpu.memory_space<vmem>>, vector<128x128xbf16>
    %cst = arith.constant dense<0.000000e+00> : vector<16x128xf32>
    %3 = tpu.matmul %1, %2, %cst {dimension_numbers = #tpu.dot_dimension_numbers<[1], [0], [0], [1], [0, 0, 1, 1], [], []>} : vector<16x128xbf16>, vector<128x128xbf16>, vector<16x128xf32> -> vector<16x128xf32>
    %c0_3 = arith.constant 0 : index
    %c0_4 = arith.constant 0 : index
    %4 = vector.load %arg4[%c0_3, %c0_4] : memref<1x128xf32, #tpu.memory_space<vmem>>, vector<1x128xf32>
    %5 = vector.broadcast %4 : vector<1x128xf32> to vector<16x128xf32>
    %6 = arith.addf %3, %5 : vector<16x128xf32>
    %7 = math.tanh %6 : vector<16x128xf32>
    %c0_5 = arith.constant 0 : index
    %c0_6 = arith.constant 0 : index
    %8 = vector.load %arg5[%c0_5, %c0_6] : memref<16x128xf32, #tpu.memory_space<vmem>>, vector<16x128xf32>
    tpu.vector_store %arg5[%c0_5, %c0_6], %7 {strides = array<i32>} : memref<16x128xf32, #tpu.memory_space<vmem>>, vector<16x128xf32>,
    return
  }
  func.func @transform_0(%arg0: i32, %arg1: i32) -> (i32, i32) {
    %c0_i32 = arith.constant 0 : i32
    %c0_i32_0 = arith.constant 0 : i32
    return %arg1, %c0_i32 : i32, i32
  }
  func.func @transform_1(%arg0: i32, %arg1: i32) -> (i32, i32) {
    %c0_i32 = arith.constant 0 : i32
    %c0_i32_0 = arith.constant 0 : i32
    return %c0_i32, %arg0 : i32, i32
  }
  func.func @transform_2(%arg0: i32, %arg1: i32) -> (i32, i32) {
    %c0_i32 = arith.constant 0 : i32
    %c0_i32_0 = arith.constant 0 : i32
    return %c0_i32, %arg0 : i32, i32
  }
  func.func @transform_3(%arg0: i32, %arg1: i32) -> (i32, i32) {
    %c0_i32 = arith.constant 0 : i32
    return %arg1, %arg0 : i32, i32
  }
}

</mosaic_0001>

<llo_original>
// kernel: tpu_custom_call.1
$region0: #{tpu_custom_call.1}
  #allocation0 [shape = 'u32[]', space=smem, size = 0x4, offset = 0x4, fixed_abs, tag = 'smem constant byte address 0x4 - core index']
  #allocation1 [shape = 'u32[144,128]{1,0:T(1,128)}', space=vmem, size = 0x12000, scoped, tag = 'internal scratch']
  %s0 = inlined_call_operand.hbm [shape: f32[16,128], index: 0, kind: input, shape index: {}]
  %s1 = inlined_call_operand.hbm [shape: bf16[128,128], index: 1, kind: input, shape index: {}]
  %s2 = inlined_call_operand.vmem [shape: f32[1,128], index: 2, kind: input, shape index: {}]
  %s3 = inlined_call_operand.hbm [shape: f32[16,128], index: 3, kind: output, shape index: {}]
  %s4 = sld [smem:[#allocation0]]
  $region30: #{tpu_custom_call.1} parent=0
    _
  %s6 = ssub.s32 1, %s4
  %s7 = scalar_select 0, %s6, %s4
  $region1: #{tpu_custom_call.1} parent=0
    #allocation2 [shape = 'u8[8192]{0}', space=vmem, size = 0x2000, scoped, tag = 'input window, operand 0, single buffered']
    #allocation3 [shape = 's32[1]{0}', space=sflag, size = 0x4, scoped, tag = 'scoped memory for tpu_custom_call.1']
    #allocation4 [shape = 's32[1]{0}', space=sflag, size = 0x4, scoped, tag = 'scoped memory for tpu_custom_call.1']
    #allocation5 [shape = 'u8[32768]{0}', space=vmem, size = 0x8000, scoped, tag = 'input window, operand 1, single buffered']
    #allocation6 [shape = 's32[1]{0}', space=sflag, size = 0x4, scoped, tag = 'scoped memory for tpu_custom_call.1']
    #allocation7 [shape = 'u8[8192]{0}', space=vmem, size = 0x2000, scoped, tag = 'output window, operand 0, single buffered']
    %8 = vsyncpa [#allocation3], 0
    %9 = vsyncpa [#allocation6], 0
    %10 = vsyncpa [#allocation4], 0
    // Predicated region
    $region2: #{tpu_custom_call.1} parent=1 // pred_check
      _
    $region3: #{tpu_custom_call.1} parent=1 // pred_check_branch
      %12 = sbr.rel (0) target = $region5
    $region4: #{tpu_custom_call.1} parent=1 // pred_region
      %s14 = ssub.s32 256, 256
      %15 = vsyncadd [#allocation3], %s14
      %s16 = sshll.u32 [#allocation2], 4
      %s17 = int_to_ptr.vmem [resolvable:$true] %s16
      %22 = dma.hbm_to_vmem [thread:$0]  %s0, 256, %s17, [#allocation3], 128, 128, 8
    $region5: #{tpu_custom_call.1} parent=1 // pred_fallthru
      _
    // Predicated region
    $region6: #{tpu_custom_call.1} parent=1 // pred_check
      _
    $region7: #{tpu_custom_call.1} parent=1 // pred_check_branch
      %24 = sbr.rel (0) target = $region9
    $region8: #{tpu_custom_call.1} parent=1 // pred_region
      %s26 = ssub.s32 1024, 1024
      %27 = vsyncadd [#allocation6], %s26
      %s28 = sshll.u32 [#allocation5], 4
      %s29 = int_to_ptr.vmem [resolvable:$true] %s28
      %34 = dma.hbm_to_vmem [thread:$0]  %s1, 1024, %s29, [#allocation6], 64, 64, 4
    $region9: #{tpu_custom_call.1} parent=1 // pred_fallthru
      _
    // Predicated region
    $region10: #{tpu_custom_call.1} parent=1 // pred_check
      _
    $region11: #{tpu_custom_call.1} parent=1 // pred_check_branch
      %36 = sbr.rel (0) target = $region13
    $region12: #{tpu_custom_call.1} parent=1 // pred_region
      _
    $region13: #{tpu_custom_call.1} parent=1 // pred_fallthru
      _
    // Predicated region
    $region14: #{tpu_custom_call.1} parent=1 // pred_check
      _
    $region15: #{tpu_custom_call.1} parent=1 // pred_check_branch
      %38 = sbr.rel (0) target = $region17
    $region16: #{tpu_custom_call.1} parent=1 // pred_region
      %39 = dma.done [#allocation3], 256
    $region17: #{tpu_custom_call.1} parent=1 // pred_fallthru
      _
    // Predicated region
    $region18: #{tpu_custom_call.1} parent=1 // pred_check
      _
    $region19: #{tpu_custom_call.1} parent=1 // pred_check_branch
      %41 = sbr.rel (0) target = $region21
    $region20: #{tpu_custom_call.1} parent=1 // pred_region
      %42 = dma.done [#allocation6], 1024
    $region21: #{tpu_custom_call.1} parent=1 // pred_fallthru
      _
    %v44 = vld [vmem:[#allocation2] sm:$0xff]
    %v45 = vld [vmem:[#allocation2 + $0x8] sm:$0xff]
    %v46 = vpack.c.bf16 %v45, %v44
    %v47 = vld [vmem:[#allocation5] sm:$0xf]
    %v48 = vld [vmem:[#allocation5 + $0x4] sm:$0xf]
    %v49 = vld [vmem:[#allocation5 + $0x8] sm:$0xf]
    %v50 = vld [vmem:[#allocation5 + $0xc] sm:$0xf]
    %v51 = vld [vmem:[#allocation5 + $0x10] sm:$0xf]
    %v52 = vld [vmem:[#allocation5 + $0x14] sm:$0xf]
    %v53 = vld [vmem:[#allocation5 + $0x18] sm:$0xf]
    %v54 = vld [vmem:[#allocation5 + $0x1c] sm:$0xf]
    %v55 = vld [vmem:[#allocation5 + $0x20] sm:$0xf]
    %v56 = vld [vmem:[#allocation5 + $0x24] sm:$0xf]
    %v57 = vld [vmem:[#allocation5 + $0x28] sm:$0xf]
    %v58 = vld [vmem:[#allocation5 + $0x2c] sm:$0xf]
    %v59 = vld [vmem:[#allocation5 + $0x30] sm:$0xf]
    %v60 = vld [vmem:[#allocation5 + $0x34] sm:$0xf]
    %v61 = vld [vmem:[#allocation5 + $0x38] sm:$0xf]
    %v62 = vld [vmem:[#allocation5 + $0x3c] sm:$0xf]
    %v63 = vld [vmem:[%s2] sm:$0x1]
    %v65 = vlaneseq
    %v66 = vshrl.u32 %v65, 7
    %v67 = vsub.s32 0, %v66
    %v68 = vrot.slane %v63, %v67
    %v86 = vunpack.c.l.b16 %v47
    %v87 = vunpack.c.l.b16 %v48
    %v88 = vunpack.c.l.b16 %v49
    %v89 = vunpack.c.l.b16 %v50
    %v90 = vunpack.c.l.b16 %v51
    %v91 = vunpack.c.l.b16 %v52
    %v92 = vunpack.c.l.b16 %v53
    %v93 = vunpack.c.l.b16 %v54
    %v94 = vunpack.c.l.b16 %v55
    %v95 = vunpack.c.l.b16 %v56
    %v96 = vunpack.c.l.b16 %v57
    %v97 = vunpack.c.l.b16 %v58
    %v98 = vunpack.c.l.b16 %v59
    %v99 = vunpack.c.l.b16 %v60
    %v100 = vunpack.c.l.b16 %v61
    %v101 = vunpack.c.l.b16 %v62
    %v102 = vpack.c.b16 %v87, %v86
    %v103 = vpack.c.b16 %v89, %v88
    %v104 = vpack.c.b16 %v91, %v90
    %v105 = vpack.c.b16 %v93, %v92
    %v106 = vpack.c.b16 %v95, %v94
    %v107 = vpack.c.b16 %v97, %v96
    %v108 = vpack.c.b16 %v99, %v98
    %v109 = vpack.c.b16 %v101, %v100
    %118 = vmatprep.subr.bf16.mxu0 0
    %119 = vmatpush1.bf16.msra.mxu0 %v102
    %120 = vmatprep.subr.bf16.mxu0 0
    %121 = vmatpush1.bf16.msra.mxu0 %v103
    %122 = vmatprep.subr.bf16.mxu0 0
    %123 = vmatpush1.bf16.msra.mxu0 %v104
    %124 = vmatprep.subr.bf16.mxu0 0
    %125 = vmatpush1.bf16.msra.mxu0 %v105
    %126 = vmatprep.subr.bf16.mxu0 0
    %127 = vmatpush1.bf16.msra.mxu0 %v106
    %128 = vmatprep.subr.bf16.mxu0 0
    %129 = vmatpush1.bf16.msra.mxu0 %v107
    %130 = vmatprep.subr.bf16.mxu0 0
    %131 = vmatpush1.bf16.msra.mxu0 %v108
    %132 = vmatprep.subr.bf16.mxu0 0
    %133 = vmatpush1.bf16.msra.mxu0 %v109
    %134 = vmatprep.subr.bf16.mxu0 0
    %135 = vmatpush1.bf16.msra.mxu0 0
    %136 = vmatprep.subr.bf16.mxu0 0
    %137 = vmatpush1.bf16.msra.mxu0 0
    %138 = vmatprep.subr.bf16.mxu0 0
    %139 = vmatpush1.bf16.msra.mxu0 0
    %140 = vmatprep.subr.bf16.mxu0 0
    %141 = vmatpush1.bf16.msra.mxu0 0
    %142 = vmatprep.subr.bf16.mxu0 0
    %143 = vmatpush1.bf16.msra.mxu0 0
    %144 = vmatprep.subr.bf16.mxu0 0
    %145 = vmatpush1.bf16.msra.mxu0 0
    %146 = vmatprep.subr.bf16.mxu0 0
    %147 = vmatpush1.bf16.msra.mxu0 0
    %148 = vmatprep.subr.bf16.mxu0 0
    %149 = vmatpush1.bf16.msra.mxu0 0
    %150 = vmatprep.mubr.bf16.mxu0 0
    %151 = vmatmul.mubr.bf16.gmra.mrb[0].mxu0 %v46
    %v152 = vpop.f32.mrb[0].mxu0
    %v153 = vadd.f32 %v68, %v152
    %v154 = vpop.f32.mrb[0].mxu0
    %v155 = vpop.f32.mrb[0].mxu0
    %v156 = vadd.f32 %v68, %v155
    %v157 = vpop.f32.mrb[0].mxu0
    %158 = vdwg.mxu0
    %v159 = vtanh.pop %v153
    %v160 = vtanh.pop %v156
    %161 = vst [vmem:[#allocation7] sm:$0xff] %v159
    %162 = vst [vmem:[#allocation7 + $0x8] sm:$0xff] %v160
    // Predicated region
    $region22: #{tpu_custom_call.1} parent=1 // pred_check
      _
    $region23: #{tpu_custom_call.1} parent=1 // pred_check_branch
      %164 = sbr.rel (0) target = $region25
    $region24: #{tpu_custom_call.1} parent=1 // pred_region
      %s166 = ssub.s32 256, 256
      %167 = vsyncadd [#allocation4], %s166
      %s168 = sshll.u32 [#allocation7], 4
      %s169 = int_to_ptr.vmem [resolvable:$true] %s168
      %174 = dma.vmem_to_hbm [thread:$0]  %s169, 256, %s3, [#allocation4], 128, 128, 8
    $region25: #{tpu_custom_call.1} parent=1 // pred_fallthru
      _
    // Predicated region
    $region26: #{tpu_custom_call.1} parent=1 // pred_check
      _
    $region27: #{tpu_custom_call.1} parent=1 // pred_check_branch
      %176 = sbr.rel (0) target = $region29
    $region28: #{tpu_custom_call.1} parent=1 // pred_region
      %177 = dma.done [#allocation4], 256
    $region29: #{tpu_custom_call.1} parent=1 // pred_fallthru
      _
    %178 = vsyncpa [#allocation3], 1
    %179 = vsyncpa [#allocation6], 1
    %180 = vsyncpa [#allocation4], 1

</llo_original>
